<compile_context>
chip_gen: v5e
topology: v5e:2x2
jax: 0.10.0
libtpu: 0.0.40
codegen_flags: <defaults>
</compile_context>

<pallas_src>
import math
import functools

import jax
import jax.numpy as jnp
from jax.experimental import pallas as pl
from jax.experimental.pallas import tpu as pltpu

LANE = 128
BASE_SUBLANES = 8           # native f32 sublane count
CHUNK_ROWS = 64             # sublane-rows per inner accumulation step (8 f32 vregs)
FAST_PATH_GROUPS = 128      # <= this many groups -> single-invocation scalar kernel
DEFAULT_BLOCK_GROUPS = 512  # ~2 MiB per input per grid step at f32


def _cdiv(a, b):
    return -(-a // b)


def _round_up(a, b):
    return _cdiv(a, b) * b


def _packing(dtype):
    return max(1, 4 // jnp.dtype(dtype).itemsize)


def _wing_elementwise(x, t, *, w, inv_e, C):
    """Elementwise wing loss in f32, matching the PyTorch module exactly."""
    x = x.astype(jnp.float32)
    t = t.astype(jnp.float32)
    # weight = 1, except weight[t == -1] = 0  =>  diff = weight * (x - t).
    # Exact float equality with -1.0, same as the reference module.
    diff = jnp.where(t == -1.0, 0.0, x - t)
    abs_diff = jnp.abs(diff)
    return jnp.where(abs_diff < w,
                     w * jnp.log1p(abs_diff * inv_e),
                     abs_diff - C)


def _wing_loss_fast_kernel(x_ref, t_ref, o_ref, *, w, inv_e, C):
    """Tiny-input path: whole array in VMEM, full reduce to an SMEM scalar."""
    y = _wing_elementwise(x_ref[...], t_ref[...], w=w, inv_e=inv_e, C=C)
    o_ref[0, 0] = jnp.sum(y)


def _wing_loss_block_kernel(x_ref, t_ref, o_ref, *, w, inv_e, C, sub, chunk,
                            gpb, groups_valid, mask_tail):
    """General path: lane-dense per-block partial sums, streamed in chunks.

    x_ref / t_ref: (gpb, sub, 128) tiles of the flattened (aligned) input.
    o_ref: (1, sub, 128) f32 partial for this grid block.
    """
    nchunks = gpb // chunk
    block_base = pl.program_id(0) * gpb

    def body(c, acc):
        start = c * chunk
        sl = pl.ds(pl.multiple_of(start, chunk), chunk)
        x = x_ref[sl, :, :].astype(jnp.float32)
        t = t_ref[sl, :, :].astype(jnp.float32)
        diff = jnp.where(t == -1.0, 0.0, x - t)
        abs_diff = jnp.abs(diff)
        if mask_tail:
            # Partial last grid block: zero groups past the end of the array
            # *before* log1p (garbage never reaches the transcendental;
            # w * log1p(0) == 0 so the contribution is exactly zero).
            grp = (block_base + start
                   + jax.lax.broadcasted_iota(jnp.int32, abs_diff.shape, 0))
            abs_diff = jnp.where(grp < groups_valid, abs_diff, 0.0)
        y = jnp.where(abs_diff < w,
                      w * jnp.log1p(abs_diff * inv_e),
                      abs_diff - C)
        # Leading-axis reduce only (pure VPU adds): (chunk, sub, 128) -> (sub, 128).
        return acc + jnp.sum(y, axis=0)

    acc = jax.lax.fori_loop(0, nchunks, body,
                            jnp.zeros((sub, LANE), jnp.float32))
    o_ref[0] = acc


def wing_loss(x, t, w=10.0, e=2.0, groups_per_block=None):
    """Pallas TPU WingLoss forward. Returns a scalar float32 (y.sum())."""
    w = float(w)
    e = float(e)
    inv_e = 1.0 / e
    C = w - w * math.log1p(w / e)

    # Dtype-aware sublane grouping: 8 rows for 4-byte, 16 for 2-byte, 32 for
    # 1-byte dtypes.  max() over both inputs keeps the narrower dtype on its
    # native packed tile; any multiple of 8 rows stays aligned for the wider one.
    sub = BASE_SUBLANES * max(_packing(x.dtype), _packing(t.dtype))
    group = sub * LANE
    chunk = max(1, CHUNK_ROWS // sub)

    xf = x.reshape(-1)
    tf = t.reshape(-1)
    n = xf.shape[0]

    G = n // group           # whole lane-dense groups (static)
    n_main = G * group
    tail = n - n_main

    tail_sum = None
    if tail > 0:
        # < one group of elements: plain jnp, no full-array pad / copy.
        xt = jax.lax.slice(xf, (n_main,), (n,))
        tt = jax.lax.slice(tf, (n_main,), (n,))
        tail_sum = jnp.sum(_wing_elementwise(xt, tt, w=w, inv_e=inv_e, C=C))

    if G == 0:
        main_sum = jnp.float32(0.0)
    else:
        if tail > 0:
            xm = jax.lax.slice(xf, (0,), (n_main,))
            tm = jax.lax.slice(tf, (0,), (n_main,))
        else:
            xm, tm = xf, tf
        x3 = xm.reshape(G, sub, LANE)
        t3 = tm.reshape(G, sub, LANE)

        in_bytes = n_main * (jnp.dtype(x.dtype).itemsize
                             + jnp.dtype(t.dtype).itemsize)

        if G <= FAST_PATH_GROUPS:
            # Tiny-input fast path: one kernel invocation, full in-kernel
            # reduction to an SMEM scalar (skips the partials HBM round trip
            # and the separate XLA reduce dispatch).
            cost = pl.CostEstimate(flops=10 * n_main, transcendentals=n_main,
                                   bytes_accessed=in_bytes + 4)
            out = pl.pallas_call(
                functools.partial(_wing_loss_fast_kernel,
                                  w=w, inv_e=inv_e, C=C),
                out_shape=jax.ShapeDtypeStruct((1, 1), jnp.float32),
                in_specs=[pl.BlockSpec(memory_space=pltpu.MemorySpace.VMEM),
                          pl.BlockSpec(memory_space=pltpu.MemorySpace.VMEM)],
                out_specs=pl.BlockSpec(memory_space=pltpu.MemorySpace.SMEM),
                cost_estimate=cost,
            )(x3, t3)
            main_sum = out[0, 0]
        else:
            # Block-size selection: ~DEFAULT_BLOCK_GROUPS groups per step
            # (~2 MiB / input / step; 8 MiB double-buffered working set fits
            # the scoped-VMEM defaults on v5e/v6e/v7x), with an even block
            # count >= 2 so a v7x megacore splits the "parallel" grid evenly.
            if groups_per_block is not None:
                gpb = max(chunk, min(int(groups_per_block), G))
                gpb = _round_up(gpb, chunk)
            else:
                nb = max(2, _cdiv(G, DEFAULT_BLOCK_GROUPS))
                if nb % 2:
                    nb += 1
                gpb = _round_up(_cdiv(G, nb), chunk)
            num_blocks = _cdiv(G, gpb)
            mask_tail = (num_blocks * gpb) != G

            kernel = functools.partial(
                _wing_loss_block_kernel, w=w, inv_e=inv_e, C=C, sub=sub,
                chunk=chunk, gpb=gpb, groups_valid=G, mask_tail=mask_tail)

            cost = pl.CostEstimate(
                flops=10 * n_main, transcendentals=n_main,
                bytes_accessed=in_bytes + num_blocks * sub * LANE * 4)

            partials = pl.pallas_call(
                kernel,
                out_shape=jax.ShapeDtypeStruct((num_blocks, sub, LANE),
                                               jnp.float32),
                grid_spec=pltpu.PrefetchScalarGridSpec(
                    num_scalar_prefetch=0,
                    grid=(num_blocks,),
                    in_specs=[
                        pl.BlockSpec((gpb, sub, LANE), lambda i: (i, 0, 0)),
                        pl.BlockSpec((gpb, sub, LANE), lambda i: (i, 0, 0)),
                    ],
                    out_specs=pl.BlockSpec((1, sub, LANE),
                                           lambda i: (i, 0, 0)),
                ),
                compiler_params=pltpu.CompilerParams(
                    # Each grid step writes its own disjoint partial -> fully
                    # parallel (v7x shards the grid across both TensorCores).
                    dimension_semantics=("parallel",),
                ),
                cost_estimate=cost,
            )(x3, t3)
            # Single cheap cross-lane reduce of the tiny partial slab.
            main_sum = jnp.sum(partials)

    return main_sum if tail_sum is None else main_sum + tail_sum


def wing_loss_ref(x, t, w=10.0, e=2.0):
    """Pure-JAX reference matching the PyTorch module exactly."""
    C = w - w * math.log(1.0 + w / e)
    weight = jnp.where(t == -1.0, 0.0, 1.0)
    diff = weight * (x - t)
    abs_diff = jnp.abs(diff)
    flag = (abs_diff < w).astype(jnp.float32)
    y = flag * w * jnp.log1p(abs_diff / e) + (1.0 - flag) * (abs_diff - C)
    return jnp.sum(y)


def _make_inputs(key, shape):
    kx, kt, km = jax.random.split(key, 3)
    x = jax.random.normal(kx, shape, dtype=jnp.float32) * 5.0
    t = jax.random.normal(kt, shape, dtype=jnp.float32) * 5.0
    # Sprinkle some "ignore" targets (t == -1) to exercise the weight mask.
    ignore = jax.random.bernoulli(km, 0.2, shape)
    t = jnp.where(ignore, -1.0, t)
    return x, t


if __name__ == "__main__":
    key = jax.random.PRNGKey(0)
    k1, k2 = jax.random.split(key, 2)

    # Primary small landmark-regression-like shape: (batch=2, channels=4, 16, 16).
    # Aligned (2048 elems = 2 groups) -> exercises the SMEM-scalar fast path.
    x, t = _make_inputs(k1, (2, 4, 16, 16))
    out = jax.block_until_ready(wing_loss(x, t, w=10.0, e=2.0))
    ref = wing_loss_ref(x, t, w=10.0, e=2.0)
    assert jnp.allclose(out, ref, rtol=5e-4, atol=1e-2), (out, ref)

    # Unaligned shape: exercises the general blocked path, the in-kernel
    # partial-block masking, and the plain-jnp tail (no full-array pad copy).
    x2, t2 = _make_inputs(k2, (2, 4, 130, 130))
    out2 = jax.block_until_ready(wing_loss(x2, t2, w=10.0, e=2.0))
    ref2 = wing_loss_ref(x2, t2, w=10.0, e=2.0)
    assert jnp.allclose(out2, ref2, rtol=5e-4, atol=1e-2), (out2, ref2)

    print("KERNEL_OK")
</pallas_src>

<mosaic_0001>
module attributes {stable_mosaic.version = 11 : i64} {
  func.func @_wing_loss_fast_kernel(%arg0: memref<2x8x128xf32, #tpu.memory_space<vmem>>, %arg1: memref<2x8x128xf32, #tpu.memory_space<vmem>>, %arg2: memref<1x1xf32, #tpu.memory_space<smem>>) attributes {dimension_semantics = [], scalar_prefetch = 0 : i64, scratch_operands = 0 : i64, tpu.core_type = #tpu.core_type<tc>} {
    %c0 = arith.constant 0 : index
    %c0_0 = arith.constant 0 : index
    %c0_1 = arith.constant 0 : index
    %0 = vector.load %arg0[%c0, %c0_0, %c0_1] : memref<2x8x128xf32, #tpu.memory_space<vmem>>, vector<2x8x128xf32>
    %c0_2 = arith.constant 0 : index
    %c0_3 = arith.constant 0 : index
    %c0_4 = arith.constant 0 : index
    %1 = vector.load %arg1[%c0_2, %c0_3, %c0_4] : memref<2x8x128xf32, #tpu.memory_space<vmem>>, vector<2x8x128xf32>
    %cst = arith.constant -1.000000e+00 : f32
    %2 = vector.broadcast %cst : f32 to vector<2x8x128xf32>
    %3 = arith.cmpf oeq, %1, %2 : vector<2x8x128xf32>
    %4 = arith.subf %0, %1 : vector<2x8x128xf32>
    %cst_5 = arith.constant 0.000000e+00 : f32
    %5 = vector.broadcast %cst_5 : f32 to vector<2x8x128xf32>
    %6 = arith.select %3, %5, %4 : vector<2x8x128xi1>, vector<2x8x128xf32>
    %7 = math.absf %6 : vector<2x8x128xf32>
    %cst_6 = arith.constant 1.000000e+01 : f32
    %8 = vector.broadcast %cst_6 : f32 to vector<2x8x128xf32>
    %9 = arith.cmpf olt, %7, %8 : vector<2x8x128xf32>
    %cst_7 = arith.constant 5.000000e-01 : f32
    %10 = vector.broadcast %cst_7 : f32 to vector<2x8x128xf32>
    %11 = arith.mulf %7, %10 : vector<2x8x128xf32>
    %12 = math.log1p %11 : vector<2x8x128xf32>
    %cst_8 = arith.constant 1.000000e+01 : f32
    %13 = vector.broadcast %cst_8 : f32 to vector<2x8x128xf32>
    %14 = arith.mulf %13, %12 : vector<2x8x128xf32>
    %cst_9 = arith.constant -7.9175949 : f32
    %15 = vector.broadcast %cst_9 : f32 to vector<2x8x128xf32>
    %16 = arith.subf %7, %15 : vector<2x8x128xf32>
    %17 = arith.select %9, %14, %16 : vector<2x8x128xi1>, vector<2x8x128xf32>
    %18 = vector.shape_cast %17 : vector<2x8x128xf32> to vector<1x2x8x128xf32>
    %cst_10 = arith.constant dense<0.000000e+00> : vector<1xf32>
    %19 = vector.multi_reduction <add>, %18, %cst_10 [1, 2, 3] : vector<1x2x8x128xf32> to vector<1xf32>
    %20 = vector.shape_cast %19 : vector<1xf32> to vector<1x1x1x1xf32>
    %21 = vector.extract %20[0, 0, 0, 0] : f32 from vector<1x1x1x1xf32>
    %c0_11 = arith.constant 0 : index
    %c0_12 = arith.constant 0 : index
    %22 = memref.load %arg2[%c0_11, %c0_12] : memref<1x1xf32, #tpu.memory_space<smem>>
    memref.store %21, %arg2[%c0_11, %c0_12] : memref<1x1xf32, #tpu.memory_space<smem>>
    return
  }
}

</mosaic_0001>

<llo_original>
// kernel: tpu_custom_call.1
$region0: #{tpu_custom_call.1}
  #allocation0 [shape = 'u32[]', space=smem, size = 0x4, offset = 0x4, fixed_abs, tag = 'smem constant byte address 0x4 - core index']
  #allocation1 [shape = 'u32[72,128]{1,0:T(1,128)}', space=vmem, size = 0x9000, scoped, tag = 'internal scratch']
  %s0 = inlined_call_operand.hbm [shape: f32[2,8,128], index: 0, kind: input, shape index: {}]
  %s1 = inlined_call_operand.hbm [shape: f32[2,8,128], index: 1, kind: input, shape index: {}]
  %s2 = inlined_call_operand.hbm [shape: f32[1,1], index: 2, kind: output, shape index: {}]
  %s3 = sld [smem:[#allocation0]]
  $region26: #{tpu_custom_call.1} parent=0
    _
  %s5 = ssub.s32 1, %s3
  %s6 = scalar_select 0, %s5, %s3
  $region1: #{tpu_custom_call.1} parent=0
    #allocation2 [shape = 'u8[8192]{0}', space=vmem, size = 0x2000, scoped, tag = 'input window, operand 0, single buffered']
    #allocation3 [shape = 's32[1]{0}', space=sflag, size = 0x4, scoped, tag = 'scoped memory for tpu_custom_call.1']
    #allocation4 [shape = 's32[1]{0}', space=sflag, size = 0x4, scoped, tag = 'scoped memory for tpu_custom_call.1']
    #allocation5 [shape = 'u8[8192]{0}', space=vmem, size = 0x2000, scoped, tag = 'input window, operand 1, single buffered']
    #allocation6 [shape = 's32[1]{0}', space=sflag, size = 0x4, scoped, tag = 'scoped memory for tpu_custom_call.1']
    #allocation7 [shape = 'u8[512]{0}', space=smem, size = 0x200, scoped, tag = 'output window, operand 0, single buffered']
    %7 = vsyncpa [#allocation3], 0
    %8 = vsyncpa [#allocation6], 0
    %9 = vsyncpa [#allocation4], 0
    // Predicated region
    $region2: #{tpu_custom_call.1} parent=1 // pred_check
      _
    $region3: #{tpu_custom_call.1} parent=1 // pred_check_branch
      %11 = sbr.rel (0) target = $region5
    $region4: #{tpu_custom_call.1} parent=1 // pred_region
      %13 = vsyncadd [#allocation3], 0
      %s14 = sshll.u32 %s0, 4
      %s15 = int_to_ptr.hbm [resolvable:$true] %s14
      %s16 = sshll.u32 [#allocation2], 4
      %s17 = int_to_ptr.vmem [resolvable:$true] %s16
      %22 = dma.hbm_to_vmem [thread:$0]  %s15, 256, %s17, [#allocation3], 128, 128, 8
    $region5: #{tpu_custom_call.1} parent=1 // pred_fallthru
      _
    // Predicated region
    $region6: #{tpu_custom_call.1} parent=1 // pred_check
      _
    $region7: #{tpu_custom_call.1} parent=1 // pred_check_branch
      %24 = sbr.rel (0) target = $region9
    $region8: #{tpu_custom_call.1} parent=1 // pred_region
      %26 = vsyncadd [#allocation6], 0
      %s27 = sshll.u32 %s1, 4
      %s28 = int_to_ptr.hbm [resolvable:$true] %s27
      %s29 = sshll.u32 [#allocation5], 4
      %s30 = int_to_ptr.vmem [resolvable:$true] %s29
      %35 = dma.hbm_to_vmem [thread:$0]  %s28, 256, %s30, [#allocation6], 128, 128, 8
    $region9: #{tpu_custom_call.1} parent=1 // pred_fallthru
      _
    // Predicated region
    $region10: #{tpu_custom_call.1} parent=1 // pred_check
      _
    $region11: #{tpu_custom_call.1} parent=1 // pred_check_branch
      %37 = sbr.rel (0) target = $region13
    $region12: #{tpu_custom_call.1} parent=1 // pred_region
      %39 = dma.done [#allocation3], 256
    $region13: #{tpu_custom_call.1} parent=1 // pred_fallthru
      _
    // Predicated region
    $region14: #{tpu_custom_call.1} parent=1 // pred_check
      _
    $region15: #{tpu_custom_call.1} parent=1 // pred_check_branch
      %41 = sbr.rel (0) target = $region17
    $region16: #{tpu_custom_call.1} parent=1 // pred_region
      %43 = dma.done [#allocation6], 256
    $region17: #{tpu_custom_call.1} parent=1 // pred_fallthru
      _
    %v44 = vld [vmem:[#allocation2] sm:$0xff]
    %v45 = vld [vmem:[#allocation2 + $0x8] sm:$0xff]
    %v46 = vld [vmem:[#allocation5] sm:$0xff]
    %v47 = vld [vmem:[#allocation5 + $0x8] sm:$0xff]
    %vm48 = vcmp.eq.f32.partialorder %v46, -1.0
    %vm49 = vcmp.eq.f32.partialorder %v47, -1.0
    %v50 = vsub.f32 %v44, %v46
    %v51 = vsub.f32 %v45, %v47
    %v52 = vsel %vm48, 0.0, %v50
    %v53 = vsel %vm49, 0.0, %v51
    %v54 = vand.u32 2147483647, %v52
    %v55 = vand.u32 2147483647, %v53
    %vm56 = vcmp.lt.f32.partialorder %v54, 10.0
    %vm57 = vcmp.lt.f32.partialorder %v55, 10.0
    %v58 = vmul.f32 %v54, 0.5
    %v59 = vmul.f32 %v55, 0.5
    %v60 = vadd.f32 %v58, 1.0
    %v61 = vlog2.pop %v60
    %v62 = vmul.f32 %v61, 0.6931472
    %v63 = vmul.f32 -0.5, %v58
    %v64 = vadd.f32 %v63, 1.0
    %v65 = vmul.f32 %v64, %v58
    %v66 = vand.u32 2147483647, %v58
    %vm67 = vcmp.lt.f32.partialorder %v66, 0.0004427343
    %v68 = vsel %vm67, %v65, %v62
    %v69 = vadd.f32 %v59, 1.0
    %v70 = vlog2.pop %v69
    %v71 = vmul.f32 %v70, 0.6931472
    %v72 = vmul.f32 -0.5, %v59
    %v73 = vadd.f32 %v72, 1.0
    %v74 = vmul.f32 %v73, %v59
    %v75 = vand.u32 2147483647, %v59
    %vm76 = vcmp.lt.f32.partialorder %v75, 0.0004427343
    %v77 = vsel %vm76, %v74, %v71
    %v78 = vmul.f32 %v68, 10.0
    %v79 = vmul.f32 %v77, 10.0
    %v80 = vsub.f32 %v54, -7.917595
    %v81 = vsub.f32 %v55, -7.917595
    %v82 = vsel %vm56, %v78, %v80
    %v83 = vsel %vm57, %v79, %v81
    %v84 = vadd.f32 %v82, %v83
    %85 = vadd.xlane.f32.xlu0 %v84
    %v86 = vpop.xlane.xlu0 %85
    %v87 = vrot.slane %v86, 4
    %v88 = vadd.f32 %v86, %v87
    %v89 = vrot.slane %v88, 2
    %v90 = vadd.f32 %v88, %v89
    %v91 = vrot.slane %v90, 1
    %v92 = vadd.f32 %v90, %v91
    %s93 = vtos %v92
    %s94 = scalar_lea.smem [#allocation7], 0
    %95 = sst [smem:[%s94]] %s93
    // Predicated region
    $region18: #{tpu_custom_call.1} parent=1 // pred_check
      _
    $region19: #{tpu_custom_call.1} parent=1 // pred_check_branch
      %97 = sbr.rel (0) target = $region21
    $region20: #{tpu_custom_call.1} parent=1 // pred_region
      %99 = vsyncadd [#allocation4], 0
      %s101 = sshll.u32 %s2, 4
      %s102 = int_to_ptr.hbm [resolvable:$true] %s101
      %104 = dma.smem_to_hbm [#allocation7], 16, %s102, [#allocation4]
    $region21: #{tpu_custom_call.1} parent=1 // pred_fallthru
      _
    // Predicated region
    $region22: #{tpu_custom_call.1} parent=1 // pred_check
      _
    $region23: #{tpu_custom_call.1} parent=1 // pred_check_branch
      %106 = sbr.rel (0) target = $region25
    $region24: #{tpu_custom_call.1} parent=1 // pred_region
      %108 = dma.done [#allocation4], 16
    $region25: #{tpu_custom_call.1} parent=1 // pred_fallthru
      _
    %109 = sfence
    %110 = vsyncpa [#allocation3], 1
    %111 = vsyncpa [#allocation6], 1
    %112 = vsyncpa [#allocation4], 1

</llo_original>
